<compile_context>
chip_gen: v6e
topology: v6e:2x2x1
jax: 0.10.0
libtpu: 0.0.40
codegen_flags: <defaults>
</compile_context>

<pallas_src>
import math

import jax
import jax.numpy as jnp
from jax.experimental import pallas as pl
from jax.experimental.pallas import tpu as pltpu

# Module hyper-parameters (from the PyTorch spec).
VOCAB_SIZE = 64
DIM = 32
MAX_SEQ_LEN = 16


def _embed_pos_kernel(tok_ref, emb_ref, pos_ref, out_ref):
    """One grid step handles TILE_T flattened tokens.

    tok_ref: (TILE_T, 1) int32   token ids for this tile
    emb_ref: (V, D)      float32 full embedding table (constant index_map ->
                                 VMEM-resident, DMA'd once)
    pos_ref: (TILE_T, D) float32 positional rows, pre-expanded per token
    out_ref: (TILE_T, D) float32
    """
    tok = tok_ref[...]                                   # (TILE_T, 1)
    emb = emb_ref[...]                                   # (V, D)
    pos = pos_ref[...]                                   # (TILE_T, D)

    tile_t = tok.shape[0]
    vocab = emb.shape[0]

    # One-hot gather on the MXU: (TILE_T, V) @ (V, D) -> (TILE_T, D).
    # Kept in f32 so the result is bit-exact w.r.t. the f32 embedding table
    # (bf16 operands would round the table and break 1e-5 agreement).
    vocab_iota = jax.lax.broadcasted_iota(jnp.int32, (tile_t, vocab), 1)
    one_hot = (vocab_iota == tok).astype(emb.dtype)      # (TILE_T, V)
    gathered = jnp.dot(one_hot, emb, preferred_element_type=jnp.float32)

    # Positional add on the VPU; store the contiguous 2-D tile.
    out_ref[...] = (gathered + pos).astype(out_ref.dtype)


def embedding_with_position(tokens, emb_table, pos_table, *, tile_t=8):
    """tokens: (B, S) int32 -> (B, S, DIM) float32.

    Note: out-of-range / negative token ids produce an all-zero one-hot row
    (zero embedding + positional term) instead of raising like nn.Embedding.
    """
    B, S = tokens.shape
    V, D = emb_table.shape
    T = B * S

    # Wrapper-side layout plumbing: flatten tokens, expand positional rows to
    # one row per flattened token, keep the kernel strictly 2-D.
    tok_flat = tokens.reshape(T, 1).astype(jnp.int32)
    pos_rows = jnp.tile(pos_table[:S, :], (B, 1))        # (T, D)

    if tile_t >= T:
        tile_t = T
    assert T % tile_t == 0 and (tile_t % 8 == 0 or tile_t == T), \
        "tile_t must divide B*S and be a multiple of 8 (or the full extent)"

    grid = (T // tile_t,)

    out_flat = pl.pallas_call(
        _embed_pos_kernel,
        out_shape=jax.ShapeDtypeStruct((T, D), jnp.float32),
        grid_spec=pltpu.PrefetchScalarGridSpec(
            num_scalar_prefetch=0,
            grid=grid,
            in_specs=[
                pl.BlockSpec((tile_t, 1), lambda i: (i, 0)),   # token tile
                pl.BlockSpec((V, D), lambda i: (0, 0)),        # table, resident
                pl.BlockSpec((tile_t, D), lambda i: (i, 0)),   # pos tile
            ],
            out_specs=pl.BlockSpec((tile_t, D), lambda i: (i, 0)),
        ),
        compiler_params=pltpu.CompilerParams(
            # v7x: shard token tiles across both TensorCores; no-op on v5e/v6e.
            dimension_semantics=("parallel",),
        ),
    )(tok_flat, emb_table, pos_rows)

    return out_flat.reshape(B, S, D)


def make_position_embedding(max_seq_len, dim):
    """Sinusoidal table identical to the PyTorch __init__ double loop."""
    i = jnp.arange(max_seq_len, dtype=jnp.float32)[:, None]      # (L, 1)
    j = jnp.arange(dim, dtype=jnp.float32)[None, :]               # (1, D)
    j_even = jnp.floor(j / 2.0) * 2.0                             # j or j-1
    freq = jnp.exp(-(j_even / dim) * math.log(10000.0))           # (1, D)
    angles = i * freq                                             # (L, D)
    is_even = (jnp.arange(dim) % 2 == 0)[None, :]
    return jnp.where(is_even, jnp.sin(angles), jnp.cos(angles)).astype(jnp.float32)


if __name__ == "__main__":
    B, S = 2, 8

    key = jax.random.PRNGKey(0)
    k_emb, k_tok = jax.random.split(key)

    # Deterministic parameter init (nn.Embedding default is N(0, 1)).
    emb_table = jax.random.normal(k_emb, (VOCAB_SIZE, DIM), dtype=jnp.float32)
    pos_table = make_position_embedding(MAX_SEQ_LEN, DIM)

    tokens = jax.random.randint(k_tok, (B, S), 0, VOCAB_SIZE, dtype=jnp.int32)

    out = embedding_with_position(tokens, emb_table, pos_table)
    out = jax.block_until_ready(out)

    # Pure-JAX reference check.
    ref = emb_table[tokens] + pos_table[None, :S, :]
    assert out.shape == (B, S, DIM)
    assert jnp.allclose(out, ref, atol=1e-5, rtol=1e-5)

    print("KERNEL_OK")
</pallas_src>

<mosaic_0001>
module attributes {stable_mosaic.version = 11 : i64} {
  func.func @_embed_pos_kernel(%arg0: i32, %arg1: memref<8x1xi32, #tpu.memory_space<vmem>>, %arg2: memref<64x32xf32, #tpu.memory_space<vmem>>, %arg3: memref<8x32xf32, #tpu.memory_space<vmem>>, %arg4: memref<8x32xf32, #tpu.memory_space<vmem>>) attributes {dimension_semantics = [#tpu.dimension_semantics<parallel>], iteration_bounds = array<i64: 2>, scalar_prefetch = 0 : i64, scratch_operands = 0 : i64, tpu.core_type = #tpu.core_type<tc>, window_params = [{transform_indices = @transform_0, window_bounds = array<i64: 8, 1>}, {pipeline_mode = #tpu.pipeline_mode<synchronous>, transform_indices = @transform_1, window_bounds = array<i64: 64, 32>}, {transform_indices = @transform_2, window_bounds = array<i64: 8, 32>}, {transform_indices = @transform_3, window_bounds = array<i64: 8, 32>}]} {
    %c0 = arith.constant 0 : index
    %c0_0 = arith.constant 0 : index
    %0 = vector.load %arg1[%c0, %c0_0] : memref<8x1xi32, #tpu.memory_space<vmem>>, vector<8x1xi32>
    %c0_1 = arith.constant 0 : index
    %c0_2 = arith.constant 0 : index
    %1 = vector.load %arg2[%c0_1, %c0_2] : memref<64x32xf32, #tpu.memory_space<vmem>>, vector<64x32xf32>
    %c0_3 = arith.constant 0 : index
    %c0_4 = arith.constant 0 : index
    %2 = vector.load %arg3[%c0_3, %c0_4] : memref<8x32xf32, #tpu.memory_space<vmem>>, vector<8x32xf32>
    %3 = tpu.iota {dimensions = array<i32: 1>} : vector<8x64xi32>
    %4 = vector.broadcast %0 : vector<8x1xi32> to vector<8x64xi32>
    %5 = arith.cmpi eq, %3, %4 : vector<8x64xi32>
    %6 = arith.extui %5 : vector<8x64xi1> to vector<8x64xi32>
    %7 = arith.sitofp %6 : vector<8x64xi32> to vector<8x64xf32>
    %cst = arith.constant dense<0.000000e+00> : vector<8x32xf32>
    %8 = tpu.matmul %7, %1, %cst {dimension_numbers = #tpu.dot_dimension_numbers<[1], [0], [0], [1], [0, 0, 1, 1], [], []>} : vector<8x64xf32>, vector<64x32xf32>, vector<8x32xf32> -> vector<8x32xf32>
    %9 = arith.addf %8, %2 : vector<8x32xf32>
    %c0_5 = arith.constant 0 : index
    %c0_6 = arith.constant 0 : index
    %10 = vector.load %arg4[%c0_5, %c0_6] : memref<8x32xf32, #tpu.memory_space<vmem>>, vector<8x32xf32>
    tpu.vector_store %arg4[%c0_5, %c0_6], %9 {strides = array<i32>} : memref<8x32xf32, #tpu.memory_space<vmem>>, vector<8x32xf32>,
    return
  }
  func.func @transform_0(%arg0: i32) -> (i32, i32) {
    %c0_i32 = arith.constant 0 : i32
    %c0_i32_0 = arith.constant 0 : i32
    return %arg0, %c0_i32 : i32, i32
  }
  func.func @transform_1(%arg0: i32) -> (i32, i32) {
    %c0_i32 = arith.constant 0 : i32
    %c0_i32_0 = arith.constant 0 : i32
    %c0_i32_1 = arith.constant 0 : i32
    return %c0_i32, %c0_i32_0 : i32, i32
  }
  func.func @transform_2(%arg0: i32) -> (i32, i32) {
    %c0_i32 = arith.constant 0 : i32
    %c0_i32_0 = arith.constant 0 : i32
    return %arg0, %c0_i32 : i32, i32
  }
  func.func @transform_3(%arg0: i32) -> (i32, i32) {
    %c0_i32 = arith.constant 0 : i32
    %c0_i32_0 = arith.constant 0 : i32
    return %arg0, %c0_i32 : i32, i32
  }
}

</mosaic_0001>

<llo_original>
// kernel: tpu_custom_call.1
$region0: #{tpu_custom_call.1}
  #allocation0 [shape = 'u32[]', space=smem, size = 0x4, offset = 0x4, fixed_abs, tag = 'smem constant byte address 0x4 - core index']
  #allocation1 [shape = 'u32[144,128]{1,0:T(1,128)}', space=vmem, size = 0x12000, scoped, tag = 'internal scratch']
  %s0 = inlined_call_operand.vmem [shape: s32[16,1], index: 0, kind: input, shape index: {}]
  %s1 = inlined_call_operand.vmem [shape: f32[64,32], index: 1, kind: input, shape index: {}]
  %s2 = inlined_call_operand.vmem [shape: f32[16,32], index: 2, kind: input, shape index: {}]
  %s3 = inlined_call_operand.hbm [shape: f32[16,32], index: 3, kind: output, shape index: {}]
  %s4 = sld [smem:[#allocation0]]
  $region45: #{tpu_custom_call.1} parent=0
    _
  %s6 = ssub.s32 1, %s4
  %s7 = scalar_select 0, %s6, %s4
  $region1: #{tpu_custom_call.1} parent=0
    #allocation2 [shape = 'u8[8192]{0}', space=vmem, size = 0x2000, scoped, tag = 'output window, operand 0']
    #allocation3 [shape = 's32[2]{0}', space=sflag, size = 0x8, scoped, tag = 'scoped memory for tpu_custom_call.1']
    %8 = vsyncpa [#allocation3], 0
    %s9 = scalar_lea.sflag [#allocation3], 1
    %10 = vsyncpa %s9, 0
    loop: start=0, step=1, limit=4
    $region2: #{tpu_custom_call.1} parent=1 // loop_pre_header
      _
    $region3: #{tpu_custom_call.1} parent=1 // loop_header
      %s12 = sphi 0, %s16
      %p13 = scmp.ge.s32.totalorder %s12, 4
      %s22 = sphi 0, %s24
      %s25 = sphi 0, %s22
      %s26 = sphi 0, %s25
      %s42 = sphi 0, %s26
      %s46 = sphi 0, %s46
      %s48 = sphi 0, %s46
      %s49 = sphi 0, %s48
      %s63 = sphi 0, %s49
      %s69 = sphi 0, %s71
      %s72 = sphi 0, %s69
      %s73 = sphi 0, %s72
      %s89 = sphi 0, %s73
      %s95 = sphi 0, %s97
      %s98 = sphi 0, %s95
      %s99 = sphi 0, %s98
      %s115 = sphi 0, %s99
    $region4: #{tpu_custom_call.1} parent=1 // loop_header_branch
      %15 = sbr.rel (%p13) target = $region8
    $region5: #{tpu_custom_call.1} parent=1 // loop_body
      %s17 = ssub.s32 %s12, 1
      %s18 = ssub.s32 %s12, 2
      %s19 = sadd.s32 %s12, 1
      %s20 = ssub.s32 %s12, %s19
      %p21 = scmp.eq.s32.totalorder %s20, 0
      %s23 = sadd.s32 %s22, 1
      %s24 = scalar_select %p21, %s22, %s23
      %p27 = pneg %p21
      %p28 = scmp.eq.s32.totalorder %s12, 1
      %p29 = por %p27, %p28
      %p30 = scmp.ne.s32.totalorder %s22, %s25
      %p31 = scmp.eq.s32.totalorder %s12, 0
      %p32 = por %p30, %p31
      %p33 = scmp.ne.s32.totalorder %s22, %s25
      %p34 = scmp.eq.s32.totalorder %s17, 1
      %p35 = por %p33, %p34
      %p36 = scmp.ne.s32.totalorder %s25, %s26
      %p37 = scmp.eq.s32.totalorder %s17, 0
      %p38 = por %p36, %p37
      %p39 = scmp.ne.s32.totalorder %s25, %s26
      %p40 = scmp.eq.s32.totalorder %s18, 1
      %p41 = por %p39, %p40
      %p43 = scmp.ne.s32.totalorder %s26, %s42
      %p44 = scmp.eq.s32.totalorder %s18, 0
      %p45 = por %p43, %p44
      %s47 = sadd.s32 %s46, 1
      %p50 = scmp.eq.s32.totalorder %s12, 1
      %p51 = scmp.ne.s32.totalorder %s46, %s48
      %p52 = scmp.eq.s32.totalorder %s12, 0
      %p53 = por %p51, %p52
      %p54 = scmp.ne.s32.totalorder %s46, %s48
      %p55 = scmp.eq.s32.totalorder %s17, 1
      %p56 = por %p54, %p55
      %p57 = scmp.ne.s32.totalorder %s48, %s49
      %p58 = scmp.eq.s32.totalorder %s17, 0
      %p59 = por %p57, %p58
      %p60 = scmp.ne.s32.totalorder %s48, %s49
      %p61 = scmp.eq.s32.totalorder %s18, 1
      %p62 = por %p60, %p61
      %p64 = scmp.ne.s32.totalorder %s49, %s63
      %p65 = scmp.eq.s32.totalorder %s18, 0
      %p66 = por %p64, %p65
      %s67 = ssub.s32 %s12, %s19
      %p68 = scmp.eq.s32.totalorder %s67, 0
      %s70 = sadd.s32 %s69, 1
      %s71 = scalar_select %p68, %s69, %s70
      %p74 = pneg %p68
      %p75 = scmp.eq.s32.totalorder %s12, 1
      %p76 = por %p74, %p75
      %p77 = scmp.ne.s32.totalorder %s69, %s72
      %p78 = scmp.eq.s32.totalorder %s12, 0
      %p79 = por %p77, %p78
      %p80 = scmp.ne.s32.totalorder %s69, %s72
      %p81 = scmp.eq.s32.totalorder %s17, 1
      %p82 = por %p80, %p81
      %p83 = scmp.ne.s32.totalorder %s72, %s73
      %p84 = scmp.eq.s32.totalorder %s17, 0
      %p85 = por %p83, %p84
      %p86 = scmp.ne.s32.totalorder %s72, %s73
      %p87 = scmp.eq.s32.totalorder %s18, 1
      %p88 = por %p86, %p87
      %p90 = scmp.ne.s32.totalorder %s73, %s89
      %p91 = scmp.eq.s32.totalorder %s18, 0
      %p92 = por %p90, %p91
      %s93 = ssub.s32 %s12, %s19
      %p94 = scmp.eq.s32.totalorder %s93, 0
      %s96 = sadd.s32 %s95, 1
      %s97 = scalar_select %p94, %s95, %s96
      %p100 = pneg %p94
      %p101 = scmp.eq.s32.totalorder %s12, 1
      %p102 = por %p100, %p101
      %p103 = scmp.ne.s32.totalorder %s95, %s98
      %p104 = scmp.eq.s32.totalorder %s12, 0
      %p105 = por %p103, %p104
      %p106 = scmp.ne.s32.totalorder %s95, %s98
      %p107 = scmp.eq.s32.totalorder %s17, 1
      %p108 = por %p106, %p107
      %p109 = scmp.ne.s32.totalorder %s98, %s99
      %p110 = scmp.eq.s32.totalorder %s17, 0
      %p111 = por %p109, %p110
      %p112 = scmp.ne.s32.totalorder %s98, %s99
      %p113 = scmp.eq.s32.totalorder %s18, 1
      %p114 = por %p112, %p113
      %p116 = scmp.ne.s32.totalorder %s99, %s115
      %p117 = scmp.eq.s32.totalorder %s18, 0
      %p118 = por %p116, %p117
      %p119 = scmp.le.s32.totalorder 1, %s12
      %p120 = scmp.lt.s32.totalorder %s12, 3
      %p121 = pnand %p119, %p120
      %p122 = pneg %p121
      // Predicated region
      $region9: #{tpu_custom_call.1} parent=5 // pred_check
        _
      $region10: #{tpu_custom_call.1} parent=5 // pred_check_branch
        %124 = sbr.rel (%p121) target = $region12
      $region11: #{tpu_custom_call.1} parent=5 // pred_region
        %s125 = ssub.s32 %s12, 1
        // Predicated region
        $region13: #{tpu_custom_call.1} parent=11 // pred_check
          %p126 = pneg %p59
        $region14: #{tpu_custom_call.1} parent=11 // pred_check_branch
          %128 = sbr.rel (%p126) target = $region16
        $region15: #{tpu_custom_call.1} parent=11 // pred_region
          _
        $region16: #{tpu_custom_call.1} parent=11 // pred_fallthru
          _
      $region12: #{tpu_custom_call.1} parent=5 // pred_fallthru
        _
      %p129 = scmp.lt.s32.totalorder %s12, 2
      // Predicated region
      $region17: #{tpu_custom_call.1} parent=5 // pred_check
        %p130 = pneg %p129
      $region18: #{tpu_custom_call.1} parent=5 // pred_check_branch
        %132 = sbr.rel (%p130) target = $region20
      $region19: #{tpu_custom_call.1} parent=5 // pred_region
        // Predicated region
        $region21: #{tpu_custom_call.1} parent=19 // pred_check
          %p133 = pneg %p32
        $region22: #{tpu_custom_call.1} parent=19 // pred_check_branch
          %135 = sbr.rel (%p133) target = $region24
        $region23: #{tpu_custom_call.1} parent=19 // pred_region
          %p136 = scmp.lt.s32.totalorder %s12, 1
          %s137 = scalar_select %p136, %s12, 1
          %s138 = smul.addr %s137, 8
          %s139 = scalar_lea.vmem %s0, %s138
        $region24: #{tpu_custom_call.1} parent=19 // pred_fallthru
          _
        // Predicated region
        $region25: #{tpu_custom_call.1} parent=19 // pred_check
          %p140 = pneg %p79
        $region26: #{tpu_custom_call.1} parent=19 // pred_check_branch
          %142 = sbr.rel (%p140) target = $region28
        $region27: #{tpu_custom_call.1} parent=19 // pred_region
          %p143 = scmp.lt.s32.totalorder %s12, 1
          %s144 = scalar_select %p143, %s12, 1
          %s145 = smul.addr %s144, 8
          %s146 = scalar_lea.vmem %s2, %s145
        $region28: #{tpu_custom_call.1} parent=19 // pred_fallthru
          _
      $region20: #{tpu_custom_call.1} parent=5 // pred_fallthru
        _
      %p147 = scmp.le.s32.totalorder 1, %s12
      %p148 = scmp.lt.s32.totalorder %s12, 3
      %p149 = pnand %p147, %p148
      %p150 = pneg %p149
      // Predicated region
      $region29: #{tpu_custom_call.1} parent=5 // pred_check
        _
      $region30: #{tpu_custom_call.1} parent=5 // pred_check_branch
        %152 = sbr.rel (%p149) target = $region32
      $region31: #{tpu_custom_call.1} parent=5 // pred_region
        %s153 = ssub.s32 %s12, 1
        %p154 = scmp.lt.s32.totalorder %s17, 1
        %s155 = scalar_select %p154, %s17, 1
        %s156 = smul.addr %s155, 8
        %s157 = scalar_lea.vmem %s0, %s156
        %p158 = pneg %p38
        %p159 = pneg %p35
        %p160 = pneg %p59
        %p161 = pneg %p56
        %p162 = scmp.lt.s32.totalorder %s17, 1
        %s163 = scalar_select %p162, %s17, 1
        %s164 = smul.addr %s163, 8
        %s165 = scalar_lea.vmem %s2, %s164
        %p166 = pneg %p85
        %p167 = pneg %p82
        %p168 = pneg %p111
        %p169 = pneg %p108
        %s170 = sand.u32 %s98, 1
        %s171 = scalar_lea.sflag [#allocation3], %s170
        %s172 = sand.u32 %s98, 1
        %s173 = smul.addr %s172, 8
        %s174 = scalar_lea.vmem [#allocation2], %s173
        %p175 = scmp.lt.s32.totalorder %s17, 1
        %s176 = scalar_select %p175, %s17, 1
        %s177 = smul.addr %s176, 8
        %s178 = scalar_lea.vmem %s0, %s177
        %p179 = scmp.lt.s32.totalorder %s17, 1
        %s180 = scalar_select %p179, %s17, 1
        %s181 = smul.addr %s180, 8
        %s182 = scalar_lea.vmem %s2, %s181
        %v183 = vld [vmem:[%s178] sm:$0xff]
        %v184 = vld [vmem:[%s1] sm:$0xff]
        %v185 = vld [vmem:[%s1 + $0x8] sm:$0xff]
        %v186 = vld [vmem:[%s1 + $0x10] sm:$0xff]
        %v187 = vld [vmem:[%s1 + $0x18] sm:$0xff]
        %v188 = vld [vmem:[%s1 + $0x20] sm:$0xff]
        %v189 = vld [vmem:[%s1 + $0x28] sm:$0xff]
        %v190 = vld [vmem:[%s1 + $0x30] sm:$0xff]
        %v191 = vld [vmem:[%s1 + $0x38] sm:$0xff]
        %v192 = vld [vmem:[%s182] sm:$0xff]
        %v193 = vlaneseq
        %v194 = vand.u32 %v193, 127
        %195 = vset.pattern.permute.xlu0 0
        %196 = vperm.xlu0 %195, %v183
        %v197 = vpop.permute.xlu0 %196
        %vm198 = vcmp.eq.s32.totalorder %v194, %v197
        %v199 = vsel %vm198, 1, 0
        %v200 = vcvt.s32.f32 %v199
        %vm201 = vcmask 523264
        %v203 = vsel %vm201, %v200, 0
        %205 = vmatprep.subr.mxu0 0.0
        %206 = vmatpush1.msra.mxu0 0.0
        %207 = vmatprep.subr.mxu0 0.0
        %208 = vmatpush1.msra.mxu0 0.0
        %209 = vmatprep.subr.mxu0 0.0
        %210 = vmatpush1.msra.mxu0 0.0
        %211 = vmatprep.subr.mxu0 0.0
        %212 = vmatpush1.msra.mxu0 0.0
        %213 = vmatprep.subr.mxu0 0.0
        %214 = vmatpush1.msra.mxu0 0.0
        %215 = vmatprep.subr.mxu0 0.0
        %216 = vmatpush1.msra.mxu0 0.0
        %217 = vmatprep.subr.mxu0 0.0
        %218 = vmatpush1.msra.mxu0 0.0
        %219 = vmatprep.subr.mxu0 0.0
        %220 = vmatpush1.msra.mxu0 0.0
        %221 = vmatprep.subr.mxu0 0.0
        %222 = vmatpush1.msra.mxu0 %v191
        %223 = vmatprep.subr.mxu0 0.0
        %224 = vmatpush1.msra.mxu0 %v190
        %225 = vmatprep.subr.mxu0 0.0
        %226 = vmatpush1.msra.mxu0 %v189
        %227 = vmatprep.subr.mxu0 0.0
        %228 = vmatpush1.msra.mxu0 %v188
        %229 = vmatprep.subr.mxu0 0.0
        %230 = vmatpush1.msra.mxu0 %v187
        %231 = vmatprep.subr.mxu0 0.0
        %232 = vmatpush1.msra.mxu0 %v186
        %233 = vmatprep.subr.mxu0 0.0
        %234 = vmatpush1.msra.mxu0 %v185
        %235 = vmatprep.subr.mxu0 0.0
        %236 = vmatpush1.msra.mxu0 %v184
        %237 = vmatprep.subr.mxu0 0.0
        %238 = vmatpush2.msra.mxu0 0.0
        %239 = vmatprep.subr.mxu0 0.0
        %240 = vmatpush2.msra.mxu0 0.0
        %241 = vmatprep.subr.mxu0 0.0
        %242 = vmatpush2.msra.mxu0 0.0
        %243 = vmatprep.subr.mxu0 0.0
        %244 = vmatpush2.msra.mxu0 0.0
        %245 = vmatprep.subr.mxu0 0.0
        %246 = vmatpush2.msra.mxu0 0.0
        %247 = vmatprep.subr.mxu0 0.0
        %248 = vmatpush2.msra.mxu0 0.0
        %249 = vmatprep.subr.mxu0 0.0
        %250 = vmatpush2.msra.mxu0 0.0
        %251 = vmatprep.subr.mxu0 0.0
        %252 = vmatpush2.msra.mxu0 0.0
        %253 = vmatprep.subr.mxu0 0.0
        %254 = vmatpush2.msra.mxu0 0.0
        %255 = vmatprep.subr.mxu0 0.0
        %256 = vmatpush2.msra.mxu0 0.0
        %257 = vmatprep.subr.mxu0 0.0
        %258 = vmatpush2.msra.mxu0 0.0
        %259 = vmatprep.subr.mxu0 0.0
        %260 = vmatpush2.msra.mxu0 0.0
        %261 = vmatprep.subr.mxu0 0.0
        %262 = vmatpush2.msra.mxu0 0.0
        %263 = vmatprep.subr.mxu0 0.0
        %264 = vmatpush2.msra.mxu0 0.0
        %265 = vmatprep.subr.mxu0 0.0
        %266 = vmatpush2.msra.mxu0 0.0
        %267 = vmatprep.subr.mxu0 0.0
        %268 = vmatpush2.msra.mxu0 0.0
        %269 = vmatprep.mubr.f32.mxu0 0.0
        %270 = vmatmul.mubr.f32.gmra.mxu0 %v203
        %v271 = vpop.f32.mrf.mxu0
        %v272 = vadd.f32 %v192, %v271
        %v273 = vpop.f32.mrf.mxu0
        %274 = vdwg.mxu0
        %vm275 = vcmask 261120
        %276 = vst.msk [vmem:[%s174] sm:$0xff] %vm275, %v272
        %s277 = sand.u32 %s98, 1
        %s278 = scalar_lea.sflag [#allocation3], %s277
        %s279 = sand.u32 %s98, 1
        %s280 = smul.addr %s279, 8
        %s281 = scalar_lea.vmem [#allocation2], %s280
        // Predicated region
        $region33: #{tpu_custom_call.1} parent=31 // pred_check
          %p282 = pneg %p108
        $region34: #{tpu_custom_call.1} parent=31 // pred_check_branch
          %284 = sbr.rel (%p282) target = $region36
        $region35: #{tpu_custom_call.1} parent=31 // pred_region
          %s286 = ssub.s32 128, 128
          %287 = vsyncadd %s278, %s286
          %s288 = smul.addr %s17, 128
          %s289 = scalar_lea.hbm %s3, %s288
          %s291 = sshll.u32 %s281, 4
          %s292 = int_to_ptr.vmem [resolvable:$true] %s291
          %294 = dma.vmem_to_hbm [thread:$0]  %s292, 128, %s289, %s278
        $region36: #{tpu_custom_call.1} parent=31 // pred_fallthru
          _
      $region32: #{tpu_custom_call.1} parent=5 // pred_fallthru
        _
      %p295 = scmp.le.s32.totalorder 2, %s12
      // Predicated region
      $region37: #{tpu_custom_call.1} parent=5 // pred_check
        %p296 = pneg %p295
      $region38: #{tpu_custom_call.1} parent=5 // pred_check_branch
        %298 = sbr.rel (%p296) target = $region40
      $region39: #{tpu_custom_call.1} parent=5 // pred_region
        %s299 = ssub.s32 %s12, 2
        // Predicated region
        $region41: #{tpu_custom_call.1} parent=39 // pred_check
          %p300 = pneg %p114
        $region42: #{tpu_custom_call.1} parent=39 // pred_check_branch
          %302 = sbr.rel (%p300) target = $region44
        $region43: #{tpu_custom_call.1} parent=39 // pred_region
          %s303 = sand.u32 %s99, 1
          %s304 = scalar_lea.sflag [#allocation3], %s303
          %s305 = sand.u32 %s99, 1
          %s306 = smul.addr %s305, 8
          %s307 = scalar_lea.vmem [#allocation2], %s306
          %308 = dma.done %s304, 128
        $region44: #{tpu_custom_call.1} parent=39 // pred_fallthru
          _
      $region40: #{tpu_custom_call.1} parent=5 // pred_fallthru
        _
    $region6: #{tpu_custom_call.1} parent=1 // loop_footer
      %s16 = sadd.s32 1, %s12
    $region7: #{tpu_custom_call.1} parent=1 // loop_footer_branch
      %11 = sbr.rel target = $region3
    $region8: #{tpu_custom_call.1} parent=1 // loop_exit
      _
    %309 = vsyncpa [#allocation3], 1
    %s310 = scalar_lea.sflag [#allocation3], 1
    %311 = vsyncpa %s310, 1

</llo_original>
